<compile_context>
chip_gen: v7x
topology: tpu7x:2x2x1
jax: 0.10.0
libtpu: 0.0.40
codegen_flags: <defaults>
</compile_context>

<pallas_src>
import math

import jax
import jax.numpy as jnp
from jax import lax
from jax.experimental import pallas as pl
from jax.experimental.pallas import tpu as pltpu


# ---------------------------------------------------------------------------
# Kernels
# ---------------------------------------------------------------------------

def _kernel_single_k(x_ref, w_ref, b_ref, o_ref):
    """One (tm, tn) output tile; the whole K dim fits in one block.

    No accumulator scratch, no revisit loop: MXU dot -> bias add -> cast.
    x_ref: (tm, Kp) compute dtype; w_ref: (tn, Kp) (PyTorch (out, in) layout);
    b_ref: (1, tn) f32; o_ref: (tm, tn) out dtype.
    """
    acc = lax.dot_general(
        x_ref[...],
        w_ref[...],
        dimension_numbers=(((1,), (1,)), ((), ())),   # x @ w.T
        preferred_element_type=jnp.float32,
    )
    o_ref[...] = (acc + b_ref[...]).astype(o_ref.dtype)


def _kernel_multi_k(x_ref, w_ref, b_ref, o_ref, acc_ref):
    """One (tm, tn) output tile accumulated over the K grid axis.

    acc_ref: (tm, tn) f32 VMEM scratch, resident across the K axis.
    """
    k = pl.program_id(2)

    dot = lax.dot_general(
        x_ref[...],
        w_ref[...],
        dimension_numbers=(((1,), (1,)), ((), ())),
        preferred_element_type=jnp.float32,
    )

    @pl.when(k == 0)
    def _():
        acc_ref[...] = dot            # overwrite: no zero-fill pass

    @pl.when(k > 0)
    def _():
        acc_ref[...] += dot

    @pl.when(k == pl.num_programs(2) - 1)
    def _():
        # f32 epilogue (bias add) then a single cast (v5e VPU has no bf16).
        o_ref[...] = (acc_ref[...] + b_ref[...]).astype(o_ref.dtype)


# ---------------------------------------------------------------------------
# Tile selection
# ---------------------------------------------------------------------------

_TM_MAX = 1024       # >= 512 FLOP/byte with tn=1024; fits all generations
_TN_MAX = 1024
_TK_MAX = 512
_K_COLLAPSE = 2048   # d_model up to this runs as a single K step


def _round_up(v, m):
    return -(-v // m) * m


def _choose_nk_tiles(N, K, tn=None, tk=None):
    """Pick (tn, tk), minimizing padding for mid-size N/K."""
    if tn is None:
        n_steps = max(1, -(-N // _TN_MAX))
        tn = _round_up(-(-N // n_steps), 128)
    if tk is None:
        if K <= _K_COLLAPSE:
            tk = _round_up(K, 128)          # single K step
        else:
            k_steps = max(1, -(-K // _TK_MAX))
            tk = _round_up(-(-K // k_steps), 128)
    return tn, tk


def _choose_m_tile(M, compute_dtype, tm=None):
    # bf16 packs 16 sublanes per vreg -> round the M tile to 16, not 8.
    m_align = 16 if jnp.dtype(compute_dtype).itemsize <= 2 else 8
    if tm is None:
        if M <= _TM_MAX:
            tm = _round_up(M, m_align)      # one M tile: weight streamed once
        else:
            m_steps = -(-M // _TM_MAX)
            tm = _round_up(-(-M // m_steps), m_align)
    return tm


# ---------------------------------------------------------------------------
# One-time parameter preprocessing (do this at parameter-load time)
# ---------------------------------------------------------------------------

def prepare_generator_params(weight, bias, *, compute_dtype=jnp.bfloat16,
                             tn=None, tk=None):
    """Cast + pad nn.Linear params once, keeping the PyTorch (N, K) layout.

    weight: (N, K) = (out_, in_); bias: (N,). Returns a dict consumed by
    generator_forward. Doing this per forward call would re-read/write the
    full vocab weight in HBM every step.
    """
    N, K = weight.shape
    tn, tk = _choose_nk_tiles(N, K, tn, tk)
    Np, Kp = _round_up(N, tn), _round_up(K, tk)

    w = weight.astype(compute_dtype)
    if (Np, Kp) != (N, K):
        w = jnp.pad(w, ((0, Np - N), (0, Kp - K)))

    b = bias.astype(jnp.float32)
    if Np != N:
        b = jnp.pad(b, ((0, Np - N),))
    b = b.reshape(1, Np)

    return dict(weight=w, bias=b, N=N, K=K, tn=tn, tk=tk,
                compute_dtype=jnp.dtype(compute_dtype))


# ---------------------------------------------------------------------------
# Forward
# ---------------------------------------------------------------------------

def generator_forward(x, params, *, tm=None, out_dtype=None):
    """y = x @ W.T + b with W/b from prepare_generator_params.

    x: (..., K). Returns (..., N) in out_dtype (default: x.dtype).
    """
    N, K = params["N"], params["K"]
    tn, tk = params["tn"], params["tk"]
    compute_dtype = params["compute_dtype"]
    w_c, b_c = params["weight"], params["bias"]
    Np, Kp = w_c.shape

    *lead, K_in = x.shape
    if K_in != K:
        raise ValueError(f"x last dim {K_in} != weight in_ dim {K}")
    M = math.prod(lead) if lead else 1
    out_dtype = jnp.dtype(x.dtype if out_dtype is None else out_dtype)

    tm = _choose_m_tile(M, compute_dtype, tm)
    Mp = _round_up(M, tm)

    # bf16 activations pass through unchanged; the cast/pad here is wrapper
    # glue for f32 callers only.
    x_c = x.reshape(M, K)
    if x_c.dtype != compute_dtype:
        x_c = x_c.astype(compute_dtype)
    if (Mp, Kp) != (M, K):
        x_c = jnp.pad(x_c, ((0, Mp - M), (0, Kp - K)))

    m_steps, n_steps, k_steps = Mp // tm, Np // tn, Kp // tk

    # VMEM footprint: double-buffered pipeline tiles (+ f32 accumulator when
    # the K axis is revisited). Cap the limit at 48 MiB so a config sized for
    # v5e/v6e (128 MiB physical) still leaves headroom on v7x (64 MiB per TC).
    c_bytes = jnp.dtype(compute_dtype).itemsize
    o_bytes = out_dtype.itemsize
    footprint = 2 * (tm * tk * c_bytes + tn * tk * c_bytes + tn * 4
                     + tm * tn * o_bytes)
    if k_steps > 1:
        footprint += tm * tn * 4
    vmem_limit = int(min(48 * 1024 * 1024,
                         max(32 * 1024 * 1024, footprint + footprint // 4)))

    cost = pl.CostEstimate(
        flops=2 * Mp * Np * Kp,
        transcendentals=0,
        # Account for x re-streamed n_steps times and W re-streamed m_steps
        # times (advisory only, but keep it honest).
        bytes_accessed=(Mp * Kp * c_bytes * n_steps
                        + Np * Kp * c_bytes * m_steps
                        + Np * 4
                        + Mp * Np * o_bytes),
    )

    if k_steps == 1:
        # K collapsed: no accumulator, no revisit loop.
        out = pl.pallas_call(
            _kernel_single_k,
            out_shape=jax.ShapeDtypeStruct((Mp, Np), out_dtype),
            grid_spec=pltpu.PrefetchScalarGridSpec(
                num_scalar_prefetch=0,
                grid=(m_steps, n_steps),
                in_specs=[
                    pl.BlockSpec((tm, Kp), lambda i, j: (i, 0)),   # x tile
                    pl.BlockSpec((tn, Kp), lambda i, j: (j, 0)),   # W tile (N,K)
                    pl.BlockSpec((1, tn), lambda i, j: (0, j)),    # bias tile
                ],
                out_specs=pl.BlockSpec((tm, tn), lambda i, j: (i, j)),
            ),
            compiler_params=pltpu.CompilerParams(
                dimension_semantics=("parallel", "parallel"),
                vmem_limit_bytes=vmem_limit,
            ),
            cost_estimate=cost,
        )(x_c, w_c, b_c)
    else:
        out = pl.pallas_call(
            _kernel_multi_k,
            out_shape=jax.ShapeDtypeStruct((Mp, Np), out_dtype),
            grid_spec=pltpu.PrefetchScalarGridSpec(
                num_scalar_prefetch=0,
                grid=(m_steps, n_steps, k_steps),
                in_specs=[
                    pl.BlockSpec((tm, tk), lambda i, j, k: (i, k)),
                    pl.BlockSpec((tn, tk), lambda i, j, k: (j, k)),
                    pl.BlockSpec((1, tn), lambda i, j, k: (0, j)),
                ],
                out_specs=pl.BlockSpec((tm, tn), lambda i, j, k: (i, j)),
                scratch_shapes=[pltpu.VMEM((tm, tn), jnp.float32)],
            ),
            compiler_params=pltpu.CompilerParams(
                # M/N tiles independent -> megacore-shardable; K last, arbitrary.
                dimension_semantics=("parallel", "parallel", "arbitrary"),
                vmem_limit_bytes=vmem_limit,
            ),
            cost_estimate=cost,
        )(x_c, w_c, b_c)

    out = out[:M, :N]
    return out.reshape(*lead, N)


# ---------------------------------------------------------------------------
# Self-test (small shapes consistent with Generator(in_=32, out_=64))
# ---------------------------------------------------------------------------

if __name__ == "__main__":
    key = jax.random.PRNGKey(0)
    kx, kw, kb, kx2, kw2 = jax.random.split(key, 5)

    B, S, IN, OUT = 2, 8, 32, 64
    x = jax.random.normal(kx, (B, S, IN), dtype=jnp.float32)
    # Deterministic synthetic "init" of nn.Linear params (not a checkpoint).
    weight = jax.random.normal(kw, (OUT, IN), dtype=jnp.float32) / jnp.sqrt(IN)
    bias = jax.random.normal(kb, (OUT,), dtype=jnp.float32) * 0.01

    y_ref = x @ weight.T + bias

    # 1) Default path: bf16 MXU operands, single-K-step kernel (K=32 -> tk=128).
    params = prepare_generator_params(weight, bias)
    y = jax.block_until_ready(generator_forward(x, params))
    assert y.shape == (B, S, OUT)
    err = float(jnp.max(jnp.abs(y - y_ref)))
    assert jnp.allclose(y, y_ref, atol=3e-2, rtol=3e-2), f"bf16 path err {err}"

    # 2) f32-compute validation path.
    params_f32 = prepare_generator_params(weight, bias, compute_dtype=jnp.float32)
    y32 = jax.block_until_ready(generator_forward(x, params_f32))
    err32 = float(jnp.max(jnp.abs(y32 - y_ref)))
    assert jnp.allclose(y32, y_ref, atol=1e-2, rtol=1e-2), f"f32 path err {err32}"

    # 3) Exercise the multi-K accumulator kernel by forcing tk < K (K=256, tk=128).
    IN2 = 256
    x2 = jax.random.normal(kx2, (B, S, IN2), dtype=jnp.float32)
    w2 = jax.random.normal(kw2, (OUT, IN2), dtype=jnp.float32) / jnp.sqrt(IN2)
    params2 = prepare_generator_params(w2, bias, tk=128)
    y2 = jax.block_until_ready(generator_forward(x2, params2))
    y2_ref = x2 @ w2.T + bias
    err2 = float(jnp.max(jnp.abs(y2 - y2_ref)))
    assert jnp.allclose(y2, y2_ref, atol=3e-2, rtol=3e-2), f"multi-K err {err2}"

    print("KERNEL_OK")
</pallas_src>

<mosaic_0001>
module attributes {stable_mosaic.version = 11 : i64} {
  func.func @_kernel_single_k(%arg0: i32, %arg1: i32, %arg2: memref<16x128xbf16, #tpu.memory_space<vmem>>, %arg3: memref<128x128xbf16, #tpu.memory_space<vmem>>, %arg4: memref<1x128xf32, #tpu.memory_space<vmem>>, %arg5: memref<16x128xf32, #tpu.memory_space<vmem>>) attributes {dimension_semantics = [#tpu.dimension_semantics<parallel>, #tpu.dimension_semantics<parallel>], iteration_bounds = array<i64: 1, 1>, scalar_prefetch = 0 : i64, scratch_operands = 0 : i64, tpu.core_type = #tpu.core_type<tc>, window_params = [{transform_indices = @transform_0, window_bounds = array<i64: 16, 128>}, {transform_indices = @transform_1, window_bounds = array<i64: 128, 128>}, {transform_indices = @transform_2, window_bounds = array<i64: 1, 128>}, {transform_indices = @transform_3, window_bounds = array<i64: 16, 128>}]} {
    %c0 = arith.constant 0 : index
    %c0_0 = arith.constant 0 : index
    %0 = vector.load %arg2[%c0, %c0_0] : memref<16x128xbf16, #tpu.memory_space<vmem>>, vector<16x128xbf16>
    %c0_1 = arith.constant 0 : index
    %c0_2 = arith.constant 0 : index
    %1 = vector.load %arg3[%c0_1, %c0_2] : memref<128x128xbf16, #tpu.memory_space<vmem>>, vector<128x128xbf16>
    %cst = arith.constant dense<0.000000e+00> : vector<16x128xf32>
    %2 = tpu.matmul %0, %1, %cst {dimension_numbers = #tpu.dot_dimension_numbers<[1], [1], [0], [0], [0, 0, 1, 0], [], []>} : vector<16x128xbf16>, vector<128x128xbf16>, vector<16x128xf32> -> vector<16x128xf32>
    %c0_3 = arith.constant 0 : index
    %c0_4 = arith.constant 0 : index
    %3 = vector.load %arg4[%c0_3, %c0_4] : memref<1x128xf32, #tpu.memory_space<vmem>>, vector<1x128xf32>
    %4 = vector.broadcast %3 : vector<1x128xf32> to vector<16x128xf32>
    %5 = arith.addf %2, %4 : vector<16x128xf32>
    %c0_5 = arith.constant 0 : index
    %c0_6 = arith.constant 0 : index
    %6 = vector.load %arg5[%c0_5, %c0_6] : memref<16x128xf32, #tpu.memory_space<vmem>>, vector<16x128xf32>
    tpu.vector_store %arg5[%c0_5, %c0_6], %5 {strides = array<i32>} : memref<16x128xf32, #tpu.memory_space<vmem>>, vector<16x128xf32>,
    return
  }
  func.func @transform_0(%arg0: i32, %arg1: i32) -> (i32, i32) {
    %c0_i32 = arith.constant 0 : i32
    %c0_i32_0 = arith.constant 0 : i32
    return %arg0, %c0_i32 : i32, i32
  }
  func.func @transform_1(%arg0: i32, %arg1: i32) -> (i32, i32) {
    %c0_i32 = arith.constant 0 : i32
    %c0_i32_0 = arith.constant 0 : i32
    return %arg1, %c0_i32 : i32, i32
  }
  func.func @transform_2(%arg0: i32, %arg1: i32) -> (i32, i32) {
    %c0_i32 = arith.constant 0 : i32
    %c0_i32_0 = arith.constant 0 : i32
    return %c0_i32, %arg1 : i32, i32
  }
  func.func @transform_3(%arg0: i32, %arg1: i32) -> (i32, i32) {
    %c0_i32 = arith.constant 0 : i32
    return %arg0, %arg1 : i32, i32
  }
}

</mosaic_0001>

<llo_original>
// kernel: tpu_custom_call.1
$region0: #{tpu_custom_call.1}
  #allocation0 [shape = 'u32[]', space=smem, size = 0x4, offset = 0x4, fixed_abs, tag = 'smem constant byte address 0x4 - core index']
  #allocation1 [shape = 'u32[144,128]{1,0:T(1,128)}', space=vmem, size = 0x12000, scoped, tag = 'internal scratch']
  %s0 = inlined_call_operand.hbm [shape: bf16[16,128], index: 0, kind: input, shape index: {}]
  %s1 = inlined_call_operand.hbm [shape: bf16[128,128], index: 1, kind: input, shape index: {}]
  %s2 = inlined_call_operand.vmem [shape: f32[1,128], index: 2, kind: input, shape index: {}]
  %s3 = inlined_call_operand.hbm [shape: f32[16,128], index: 3, kind: output, shape index: {}]
  %s4 = sld [smem:[#allocation0]]
  $region30: #{tpu_custom_call.1} parent=0
    _
  %s6 = ssub.s32 1, %s4
  %s7 = scalar_select 0, %s6, %s4
  $region1: #{tpu_custom_call.1} parent=0
    #allocation2 [shape = 'u8[4096]{0}', space=vmem, size = 0x1000, scoped, tag = 'input window, operand 0, single buffered']
    #allocation3 [shape = 's32[1]{0}', space=sflag, size = 0x4, scoped, tag = 'scoped memory for tpu_custom_call.1']
    #allocation4 [shape = 's32[1]{0}', space=sflag, size = 0x4, scoped, tag = 'scoped memory for tpu_custom_call.1']
    #allocation5 [shape = 'u8[32768]{0}', space=vmem, size = 0x8000, scoped, tag = 'input window, operand 1, single buffered']
    #allocation6 [shape = 's32[1]{0}', space=sflag, size = 0x4, scoped, tag = 'scoped memory for tpu_custom_call.1']
    #allocation7 [shape = 'u8[8192]{0}', space=vmem, size = 0x2000, scoped, tag = 'output window, operand 0, single buffered']
    %8 = vsyncpa [#allocation3], 0
    %9 = vsyncpa [#allocation6], 0
    %10 = vsyncpa [#allocation4], 0
    // Predicated region
    $region2: #{tpu_custom_call.1} parent=1 // pred_check
      _
    $region3: #{tpu_custom_call.1} parent=1 // pred_check_branch
      %12 = sbr.rel (0) target = $region5
    $region4: #{tpu_custom_call.1} parent=1 // pred_region
      %s14 = ssub.s32 128, 128
      %15 = vsyncadd [#allocation3], %s14
      %s16 = sshll.u32 [#allocation2], 4
      %s17 = int_to_ptr.vmem [resolvable:$true] %s16
      %22 = dma.hbm_to_vmem [thread:$0]  %s0, 128, %s17, [#allocation3], 64, 64, 4
    $region5: #{tpu_custom_call.1} parent=1 // pred_fallthru
      _
    // Predicated region
    $region6: #{tpu_custom_call.1} parent=1 // pred_check
      _
    $region7: #{tpu_custom_call.1} parent=1 // pred_check_branch
      %24 = sbr.rel (0) target = $region9
    $region8: #{tpu_custom_call.1} parent=1 // pred_region
      %s26 = ssub.s32 1024, 1024
      %27 = vsyncadd [#allocation6], %s26
      %s28 = sshll.u32 [#allocation5], 4
      %s29 = int_to_ptr.vmem [resolvable:$true] %s28
      %34 = dma.hbm_to_vmem [thread:$0]  %s1, 1024, %s29, [#allocation6], 64, 64, 4
    $region9: #{tpu_custom_call.1} parent=1 // pred_fallthru
      _
    // Predicated region
    $region10: #{tpu_custom_call.1} parent=1 // pred_check
      _
    $region11: #{tpu_custom_call.1} parent=1 // pred_check_branch
      %36 = sbr.rel (0) target = $region13
    $region12: #{tpu_custom_call.1} parent=1 // pred_region
      _
    $region13: #{tpu_custom_call.1} parent=1 // pred_fallthru
      _
    // Predicated region
    $region14: #{tpu_custom_call.1} parent=1 // pred_check
      _
    $region15: #{tpu_custom_call.1} parent=1 // pred_check_branch
      %38 = sbr.rel (0) target = $region17
    $region16: #{tpu_custom_call.1} parent=1 // pred_region
      %39 = dma.done [#allocation3], 128
    $region17: #{tpu_custom_call.1} parent=1 // pred_fallthru
      _
    // Predicated region
    $region18: #{tpu_custom_call.1} parent=1 // pred_check
      _
    $region19: #{tpu_custom_call.1} parent=1 // pred_check_branch
      %41 = sbr.rel (0) target = $region21
    $region20: #{tpu_custom_call.1} parent=1 // pred_region
      %42 = dma.done [#allocation6], 1024
    $region21: #{tpu_custom_call.1} parent=1 // pred_fallthru
      _
    %v44 = vld [vmem:[#allocation2] sm:$0xf]
    %v45 = vld [vmem:[#allocation2 + $0x4] sm:$0xf]
    %v46 = vld [vmem:[#allocation5] sm:$0xf]
    %v47 = vld [vmem:[#allocation5 + $0x4] sm:$0xf]
    %v48 = vld [vmem:[#allocation5 + $0x8] sm:$0xf]
    %v49 = vld [vmem:[#allocation5 + $0xc] sm:$0xf]
    %v50 = vld [vmem:[#allocation5 + $0x10] sm:$0xf]
    %v51 = vld [vmem:[#allocation5 + $0x14] sm:$0xf]
    %v52 = vld [vmem:[#allocation5 + $0x18] sm:$0xf]
    %v53 = vld [vmem:[#allocation5 + $0x1c] sm:$0xf]
    %v54 = vld [vmem:[#allocation5 + $0x20] sm:$0xf]
    %v55 = vld [vmem:[#allocation5 + $0x24] sm:$0xf]
    %v56 = vld [vmem:[#allocation5 + $0x28] sm:$0xf]
    %v57 = vld [vmem:[#allocation5 + $0x2c] sm:$0xf]
    %v58 = vld [vmem:[#allocation5 + $0x30] sm:$0xf]
    %v59 = vld [vmem:[#allocation5 + $0x34] sm:$0xf]
    %v60 = vld [vmem:[#allocation5 + $0x38] sm:$0xf]
    %v61 = vld [vmem:[#allocation5 + $0x3c] sm:$0xf]
    %v62 = vld [vmem:[%s2] sm:$0x1]
    %v64 = vlaneseq
    %v65 = vshrl.u32 %v64, 7
    %v66 = vsub.s32 0, %v65
    %v67 = vrot.slane %v62, %v66
    %v71 = vunpack.c.l.b16 %v44
    %v72 = vunpack.c.l.b16 %v45
    %v73 = vpack.c.b16 %v72, %v71
    %v91 = vunpack.c.l.b16 %v46
    %v92 = vunpack.c.l.b16 %v47
    %v93 = vunpack.c.l.b16 %v48
    %v94 = vunpack.c.l.b16 %v49
    %v95 = vunpack.c.l.b16 %v50
    %v96 = vunpack.c.l.b16 %v51
    %v97 = vunpack.c.l.b16 %v52
    %v98 = vunpack.c.l.b16 %v53
    %v99 = vunpack.c.l.b16 %v54
    %v100 = vunpack.c.l.b16 %v55
    %v101 = vunpack.c.l.b16 %v56
    %v102 = vunpack.c.l.b16 %v57
    %v103 = vunpack.c.l.b16 %v58
    %v104 = vunpack.c.l.b16 %v59
    %v105 = vunpack.c.l.b16 %v60
    %v106 = vunpack.c.l.b16 %v61
    %v107 = vpack.c.b16 %v92, %v91
    %v108 = vpack.c.b16 %v94, %v93
    %v109 = vpack.c.b16 %v96, %v95
    %v110 = vpack.c.b16 %v98, %v97
    %v111 = vpack.c.b16 %v100, %v99
    %v112 = vpack.c.b16 %v102, %v101
    %v113 = vpack.c.b16 %v104, %v103
    %v114 = vpack.c.b16 %v106, %v105
    %123 = vmatprep.subr.bf16.mxu0 0
    %124 = vmatpush1.bf16.xpose.msra.mxu0 %v107
    %125 = vmatprep.subr.bf16.mxu0 0
    %126 = vmatpush1.bf16.xpose.msra.mxu0 %v108
    %127 = vmatprep.subr.bf16.mxu0 0
    %128 = vmatpush1.bf16.xpose.msra.mxu0 %v109
    %129 = vmatprep.subr.bf16.mxu0 0
    %130 = vmatpush1.bf16.xpose.msra.mxu0 %v110
    %131 = vmatprep.subr.bf16.mxu0 0
    %132 = vmatpush1.bf16.xpose.msra.mxu0 %v111
    %133 = vmatprep.subr.bf16.mxu0 0
    %134 = vmatpush1.bf16.xpose.msra.mxu0 %v112
    %135 = vmatprep.subr.bf16.mxu0 0
    %136 = vmatpush1.bf16.xpose.msra.mxu0 %v113
    %137 = vmatprep.subr.bf16.mxu0 0
    %138 = vmatpush1.bf16.xpose.msra.mxu0 %v114
    %139 = vmatprep.subr.bf16.mxu0 0
    %140 = vmatpush1.bf16.xpose.msra.mxu0 0
    %141 = vmatprep.subr.bf16.mxu0 0
    %142 = vmatpush1.bf16.xpose.msra.mxu0 0
    %143 = vmatprep.subr.bf16.mxu0 0
    %144 = vmatpush1.bf16.xpose.msra.mxu0 0
    %145 = vmatprep.subr.bf16.mxu0 0
    %146 = vmatpush1.bf16.xpose.msra.mxu0 0
    %147 = vmatprep.subr.bf16.mxu0 0
    %148 = vmatpush1.bf16.xpose.msra.mxu0 0
    %149 = vmatprep.subr.bf16.mxu0 0
    %150 = vmatpush1.bf16.xpose.msra.mxu0 0
    %151 = vmatprep.subr.bf16.mxu0 0
    %152 = vmatpush1.bf16.xpose.msra.mxu0 0
    %153 = vmatprep.subr.bf16.mxu0 0
    %154 = vmatpush1.bf16.xpose.msra.mxu0 0
    %155 = vmatprep.mubr.bf16.mxu0 0
    %156 = vmatmul.mubr.bf16.gmra.mrb[0].mxu0 %v73
    %v157 = vpop.f32.mrb[0].mxu0
    %v158 = vadd.f32 %v67, %v157
    %v159 = vpop.f32.mrb[0].mxu0
    %v160 = vpop.f32.mrb[0].mxu0
    %v161 = vadd.f32 %v67, %v160
    %v162 = vpop.f32.mrb[0].mxu0
    %163 = vdwg.mxu0
    %164 = vst [vmem:[#allocation7] sm:$0xff] %v158
    %165 = vst [vmem:[#allocation7 + $0x8] sm:$0xff] %v161
    // Predicated region
    $region22: #{tpu_custom_call.1} parent=1 // pred_check
      _
    $region23: #{tpu_custom_call.1} parent=1 // pred_check_branch
      %167 = sbr.rel (0) target = $region25
    $region24: #{tpu_custom_call.1} parent=1 // pred_region
      %s169 = ssub.s32 256, 256
      %170 = vsyncadd [#allocation4], %s169
      %s171 = sshll.u32 [#allocation7], 4
      %s172 = int_to_ptr.vmem [resolvable:$true] %s171
      %177 = dma.vmem_to_hbm [thread:$0]  %s172, 256, %s3, [#allocation4], 128, 128, 8
    $region25: #{tpu_custom_call.1} parent=1 // pred_fallthru
      _
    // Predicated region
    $region26: #{tpu_custom_call.1} parent=1 // pred_check
      _
    $region27: #{tpu_custom_call.1} parent=1 // pred_check_branch
      %179 = sbr.rel (0) target = $region29
    $region28: #{tpu_custom_call.1} parent=1 // pred_region
      %180 = dma.done [#allocation4], 256
    $region29: #{tpu_custom_call.1} parent=1 // pred_fallthru
      _
    %181 = vsyncpa [#allocation3], 1
    %182 = vsyncpa [#allocation6], 1
    %183 = vsyncpa [#allocation4], 1

</llo_original>
